<compile_context>
chip_gen: v5e
topology: v5e:2x2
jax: 0.10.0
libtpu: 0.0.40
codegen_flags: <defaults>
</compile_context>

<pallas_src>
import functools

import jax
import jax.numpy as jnp
from jax.experimental import pallas as pl
from jax.experimental.pallas import tpu as pltpu

LANE = 128
VMEM_LIMIT = 48 * 1024 * 1024  # fits under v7x's 64 MiB physical VMEM


def _round_up(a, b):
    return (a + b - 1) // b * b


def _pick_tile(n_pad, preferred=256):
    # n_pad is a multiple of 128; prefer 256-wide tiles (v6e 256x256 MXU),
    # fall back to 128 (v5e-friendly, always divides).
    return preferred if n_pad % preferred == 0 else 128


# ---------------------------------------------------------------------------
# Kernel 1: one intermediate propagation hop, tiled matmul  out = S @ h
#   grid = (row tiles [parallel], reduction tiles [arbitrary])
#   bf16 MXU inputs, f32 accumulator scratch, pl.when init/finalize.
# ---------------------------------------------------------------------------
def prop_kernel(s_ref, h_ref, o_ref, acc_ref):
    @pl.when(pl.program_id(1) == 0)
    def _():
        acc_ref[...] = jnp.zeros_like(acc_ref)

    acc_ref[...] += jnp.dot(
        s_ref[...], h_ref[...], preferred_element_type=jnp.float32
    )

    @pl.when(pl.program_id(1) == pl.num_programs(1) - 1)
    def _():
        o_ref[...] = acc_ref[...].astype(o_ref.dtype)


def propagate_once(S, h, *, tm, tk):
    n_pad = S.shape[0]
    c_pad = h.shape[1]
    return pl.pallas_call(
        prop_kernel,
        out_shape=jax.ShapeDtypeStruct((n_pad, c_pad), jnp.bfloat16),
        grid_spec=pltpu.PrefetchScalarGridSpec(
            num_scalar_prefetch=0,
            grid=(n_pad // tm, n_pad // tk),
            in_specs=[
                pl.BlockSpec((tm, tk), lambda i, k: (i, k)),
                pl.BlockSpec((tk, c_pad), lambda i, k: (k, 0)),
            ],
            out_specs=pl.BlockSpec((tm, c_pad), lambda i, k: (i, 0)),
            scratch_shapes=[pltpu.VMEM((tm, c_pad), jnp.float32)],
        ),
        compiler_params=pltpu.CompilerParams(
            dimension_semantics=("parallel", "arbitrary"),
            vmem_limit_bytes=VMEM_LIMIT,
        ),
    )(S, h)


# ---------------------------------------------------------------------------
# Kernel 2a: FINAL hop fused with head, Wc applied AFTER propagation
#   (C_in <= num_hid):
#   acc = sum_k S[i,k] @ h[k]           (reduction over k, f32 accumulator)
#   out = relu(acc @ Wc + bc) @ Wl + bl (dropout = identity, inference)
# ---------------------------------------------------------------------------
def prop_head_wc_kernel(s_ref, h_ref, wc_ref, bc_ref, wl_ref, bl_ref,
                        o_ref, acc_ref):
    @pl.when(pl.program_id(1) == 0)
    def _():
        acc_ref[...] = jnp.zeros_like(acc_ref)

    acc_ref[...] += jnp.dot(
        s_ref[...], h_ref[...], preferred_element_type=jnp.float32
    )

    @pl.when(pl.program_id(1) == pl.num_programs(1) - 1)
    def _():
        z = jnp.dot(acc_ref[...].astype(wc_ref.dtype), wc_ref[...],
                    preferred_element_type=jnp.float32)
        z = jnp.maximum(z + bc_ref[...], 0.0)
        # TODO(synk): training-mode dropout (p=0.1) would use pltpu.prng_seed /
        # pltpu.prng_random_bits; inference mode (identity) is implemented here.
        o_ref[...] = (
            jnp.dot(z.astype(wl_ref.dtype), wl_ref[...],
                    preferred_element_type=jnp.float32)
            + bl_ref[...]
        ).astype(o_ref.dtype)


# ---------------------------------------------------------------------------
# Kernel 2b: FINAL hop fused with head, Wc already applied BEFORE propagation
#   (num_hid < C_in):
#   acc = sum_k S[i,k] @ h[k]           (h = x @ Wc, propagated)
#   out = relu(acc + bc) @ Wl + bl
# ---------------------------------------------------------------------------
def prop_head_nowc_kernel(s_ref, h_ref, bc_ref, wl_ref, bl_ref,
                          o_ref, acc_ref):
    @pl.when(pl.program_id(1) == 0)
    def _():
        acc_ref[...] = jnp.zeros_like(acc_ref)

    acc_ref[...] += jnp.dot(
        s_ref[...], h_ref[...], preferred_element_type=jnp.float32
    )

    @pl.when(pl.program_id(1) == pl.num_programs(1) - 1)
    def _():
        z = jnp.maximum(acc_ref[...] + bc_ref[...], 0.0)
        o_ref[...] = (
            jnp.dot(z.astype(wl_ref.dtype), wl_ref[...],
                    preferred_element_type=jnp.float32)
            + bl_ref[...]
        ).astype(o_ref.dtype)


# ---------------------------------------------------------------------------
# Kernel 3 (only for the num_hid < C_in branch): h0 = x @ Wc (no bias yet)
# ---------------------------------------------------------------------------
def input_linear_kernel(x_ref, wc_ref, o_ref):
    o_ref[...] = jnp.dot(
        x_ref[...], wc_ref[...], preferred_element_type=jnp.float32
    ).astype(o_ref.dtype)


# ---------------------------------------------------------------------------
# Glue: dense gcn_norm adjacency (self-loops + symmetric normalization),
# matching torch_geometric's gcn_norm for SGConv. Precompute ONCE per graph,
# already padded + bf16 in the layout the kernels consume.
# ---------------------------------------------------------------------------
def build_norm_adj(edge_index, num_nodes, edge_weight=None, *, pad_to=None):
    src = edge_index[0]
    dst = edge_index[1]
    if edge_weight is None:
        edge_weight = jnp.ones(src.shape[0], dtype=jnp.float32)
    A = jnp.zeros((num_nodes, num_nodes), dtype=jnp.float32)
    A = A.at[dst, src].add(edge_weight)            # messages flow source -> target
    A = A + jnp.eye(num_nodes, dtype=jnp.float32)  # self-loops
    deg = A.sum(axis=1)
    dinv = jnp.where(deg > 0.0, jax.lax.rsqrt(deg), 0.0)
    S = dinv[:, None] * A * dinv[None, :]
    if pad_to is not None and pad_to > num_nodes:
        S = jnp.zeros((pad_to, pad_to), jnp.float32).at[:num_nodes, :num_nodes].set(S)
    return S.astype(jnp.bfloat16)


@functools.partial(jax.jit, static_argnames=("K", "num_nodes"))
def sgc2_forward(x, S_padded, params, *, K, num_nodes):
    """out = lin(dropout(relu(SGConv_K(x)))) with dropout = identity (eval)."""
    assert K >= 1, "SGConv requires at least one propagation hop"
    Wc, bc, Wl, bl = params
    in_channels = x.shape[1]
    num_hid = Wc.shape[1]
    out_channels = Wl.shape[1]

    n_pad = S_padded.shape[0]
    cin_pad = _round_up(in_channels, LANE)
    hid_pad = _round_up(num_hid, LANE)
    out_pad = _round_up(out_channels, LANE)
    tm = _pick_tile(n_pad)
    tk = _pick_tile(n_pad)

    # Lane-dense zero padding (padded features/weights contribute exactly 0).
    x_p = jnp.zeros((n_pad, cin_pad), jnp.bfloat16)
    x_p = x_p.at[:num_nodes, :in_channels].set(x.astype(jnp.bfloat16))
    Wc_p = jnp.zeros((cin_pad, hid_pad), jnp.bfloat16)
    Wc_p = Wc_p.at[:in_channels, :num_hid].set(Wc.astype(jnp.bfloat16))
    bc_p = jnp.zeros((1, hid_pad), jnp.float32).at[:, :num_hid].set(bc)
    Wl_p = jnp.zeros((hid_pad, out_pad), jnp.bfloat16)
    Wl_p = Wl_p.at[:num_hid, :out_channels].set(Wl.astype(jnp.bfloat16))
    bl_p = jnp.zeros((1, out_pad), jnp.float32).at[:, :out_channels].set(bl)

    # Propagate the narrower representation:  S^K(x Wc) == (S^K x) Wc.
    apply_wc_after = in_channels <= num_hid

    if apply_wc_after:
        h = x_p
        feat_pad = cin_pad
    else:
        feat_pad = hid_pad
        h = pl.pallas_call(
            input_linear_kernel,
            out_shape=jax.ShapeDtypeStruct((n_pad, hid_pad), jnp.bfloat16),
            grid_spec=pltpu.PrefetchScalarGridSpec(
                num_scalar_prefetch=0,
                grid=(n_pad // tm,),
                in_specs=[
                    pl.BlockSpec((tm, cin_pad), lambda i: (i, 0)),
                    pl.BlockSpec((cin_pad, hid_pad), lambda i: (0, 0)),
                ],
                out_specs=pl.BlockSpec((tm, hid_pad), lambda i: (i, 0)),
            ),
            compiler_params=pltpu.CompilerParams(
                dimension_semantics=("parallel",),
                vmem_limit_bytes=VMEM_LIMIT,
            ),
        )(x_p, Wc_p)

    # Hops 1 .. K-1: plain tiled, double-buffered propagation.
    for _ in range(K - 1):
        h = propagate_once(S_padded, h, tm=tm, tk=tk)

    # Final hop: propagation fused with the head (Wc / bias / ReLU / Wl / bias),
    # no HBM roundtrip of the final activation.
    grid = (n_pad // tm, n_pad // tk)
    if apply_wc_after:
        out_p = pl.pallas_call(
            prop_head_wc_kernel,
            out_shape=jax.ShapeDtypeStruct((n_pad, out_pad), jnp.float32),
            grid_spec=pltpu.PrefetchScalarGridSpec(
                num_scalar_prefetch=0,
                grid=grid,
                in_specs=[
                    pl.BlockSpec((tm, tk), lambda i, k: (i, k)),
                    pl.BlockSpec((tk, cin_pad), lambda i, k: (k, 0)),
                    pl.BlockSpec((cin_pad, hid_pad), lambda i, k: (0, 0)),
                    pl.BlockSpec((1, hid_pad), lambda i, k: (0, 0)),
                    pl.BlockSpec((hid_pad, out_pad), lambda i, k: (0, 0)),
                    pl.BlockSpec((1, out_pad), lambda i, k: (0, 0)),
                ],
                out_specs=pl.BlockSpec((tm, out_pad), lambda i, k: (i, 0)),
                scratch_shapes=[pltpu.VMEM((tm, cin_pad), jnp.float32)],
            ),
            compiler_params=pltpu.CompilerParams(
                dimension_semantics=("parallel", "arbitrary"),
                vmem_limit_bytes=VMEM_LIMIT,
            ),
        )(S_padded, h, Wc_p, bc_p, Wl_p, bl_p)
    else:
        out_p = pl.pallas_call(
            prop_head_nowc_kernel,
            out_shape=jax.ShapeDtypeStruct((n_pad, out_pad), jnp.float32),
            grid_spec=pltpu.PrefetchScalarGridSpec(
                num_scalar_prefetch=0,
                grid=grid,
                in_specs=[
                    pl.BlockSpec((tm, tk), lambda i, k: (i, k)),
                    pl.BlockSpec((tk, hid_pad), lambda i, k: (k, 0)),
                    pl.BlockSpec((1, hid_pad), lambda i, k: (0, 0)),
                    pl.BlockSpec((hid_pad, out_pad), lambda i, k: (0, 0)),
                    pl.BlockSpec((1, out_pad), lambda i, k: (0, 0)),
                ],
                out_specs=pl.BlockSpec((tm, out_pad), lambda i, k: (i, 0)),
                scratch_shapes=[pltpu.VMEM((tm, hid_pad), jnp.float32)],
            ),
            compiler_params=pltpu.CompilerParams(
                dimension_semantics=("parallel", "arbitrary"),
                vmem_limit_bytes=VMEM_LIMIT,
            ),
        )(S_padded, h, bc_p, Wl_p, bl_p)

    del feat_pad
    # Slice off lane / node padding in the wrapper (output spec stays lane-dense).
    return out_p[:num_nodes, :out_channels]


# ---------------------------------------------------------------------------
# Deterministic parameter init (shapes from SGC2.__init__)
# ---------------------------------------------------------------------------
def init_params(key, in_channels, num_hid, out_channels):
    k1, k2, k3, k4 = jax.random.split(key, 4)
    Wc = (jax.random.normal(k1, (in_channels, num_hid), jnp.float32)
          * (1.0 / jnp.sqrt(in_channels)))
    bc = jax.random.normal(k2, (1, num_hid), jnp.float32) * 0.01
    Wl = (jax.random.normal(k3, (num_hid, out_channels), jnp.float32)
          * (1.0 / jnp.sqrt(num_hid)))
    bl = jax.random.normal(k4, (1, out_channels), jnp.float32) * 0.01
    return Wc, bc, Wl, bl


if __name__ == "__main__":
    key = jax.random.PRNGKey(0)
    k_x, k_e, k_p = jax.random.split(key, 3)

    # small synthetic graph
    N = 16              # nodes
    E = 40              # directed edges
    in_channels = 8
    num_hid = 32
    out_channels = 4
    K = 2               # propagation hops

    x = jax.random.normal(k_x, (N, in_channels), jnp.float32)
    edge_index = jax.random.randint(k_e, (2, E), 0, N, dtype=jnp.int32)
    params = init_params(k_p, in_channels, num_hid, out_channels)

    # Precompute (amortize) the normalized adjacency once per graph,
    # already padded to a lane-dense multiple of 128 and cast to bf16.
    n_pad = _round_up(N, LANE)
    S_padded = build_norm_adj(edge_index, N, pad_to=n_pad)

    out = sgc2_forward(x, S_padded, params, K=K, num_nodes=N)
    jax.block_until_ready(out)

    assert out.shape == (N, out_channels)
    assert out.dtype == jnp.float32
    print("KERNEL_OK")
</pallas_src>

<mosaic_0001>
module attributes {stable_mosaic.version = 11 : i64} {
  func.func @prop_kernel(%arg0: i32, %arg1: i32, %arg2: memref<128x128xbf16, #tpu.memory_space<vmem>>, %arg3: memref<128x128xbf16, #tpu.memory_space<vmem>>, %arg4: memref<128x128xbf16, #tpu.memory_space<vmem>>, %arg5: memref<128x128xf32, #tpu.memory_space<vmem>>) attributes {dimension_semantics = [#tpu.dimension_semantics<parallel>, #tpu.dimension_semantics<arbitrary>], iteration_bounds = array<i64: 1, 1>, scalar_prefetch = 0 : i64, scratch_operands = 1 : i64, tpu.core_type = #tpu.core_type<tc>, window_params = [{transform_indices = @transform_0, window_bounds = array<i64: 128, 128>}, {transform_indices = @transform_1, window_bounds = array<i64: 128, 128>}, {transform_indices = @transform_2, window_bounds = array<i64: 128, 128>}]} {
    %c0_i32 = arith.constant 0 : i32
    %0 = arith.cmpi eq, %arg1, %c0_i32 : i32
    %1 = arith.extui %0 : i1 to i32
    %c0_i32_0 = arith.constant 0 : i32
    %2 = arith.cmpi ne, %1, %c0_i32_0 : i32
    scf.if %2 {
      %cst_10 = arith.constant 0.000000e+00 : f32
      %12 = vector.broadcast %cst_10 : f32 to vector<128x128xf32>
      %c0_11 = arith.constant 0 : index
      %c0_12 = arith.constant 0 : index
      %13 = vector.load %arg5[%c0_11, %c0_12] : memref<128x128xf32, #tpu.memory_space<vmem>>, vector<128x128xf32>
      tpu.vector_store %arg5[%c0_11, %c0_12], %12 {strides = array<i32>} : memref<128x128xf32, #tpu.memory_space<vmem>>, vector<128x128xf32>,
    } else {
    }
    %c0 = arith.constant 0 : index
    %c0_1 = arith.constant 0 : index
    %3 = vector.load %arg5[%c0, %c0_1] : memref<128x128xf32, #tpu.memory_space<vmem>>, vector<128x128xf32>
    %c0_2 = arith.constant 0 : index
    %c0_3 = arith.constant 0 : index
    %4 = vector.load %arg2[%c0_2, %c0_3] : memref<128x128xbf16, #tpu.memory_space<vmem>>, vector<128x128xbf16>
    %c0_4 = arith.constant 0 : index
    %c0_5 = arith.constant 0 : index
    %5 = vector.load %arg3[%c0_4, %c0_5] : memref<128x128xbf16, #tpu.memory_space<vmem>>, vector<128x128xbf16>
    %cst = arith.constant dense<0.000000e+00> : vector<128x128xf32>
    %6 = tpu.matmul %4, %5, %cst {dimension_numbers = #tpu.dot_dimension_numbers<[1], [0], [0], [1], [0, 0, 1, 1], [], []>} : vector<128x128xbf16>, vector<128x128xbf16>, vector<128x128xf32> -> vector<128x128xf32>
    %7 = arith.addf %3, %6 : vector<128x128xf32>
    %c0_6 = arith.constant 0 : index
    %c0_7 = arith.constant 0 : index
    %8 = vector.load %arg5[%c0_6, %c0_7] : memref<128x128xf32, #tpu.memory_space<vmem>>, vector<128x128xf32>
    tpu.vector_store %arg5[%c0_6, %c0_7], %7 {strides = array<i32>} : memref<128x128xf32, #tpu.memory_space<vmem>>, vector<128x128xf32>,
    %c0_i32_8 = arith.constant 0 : i32
    %9 = arith.cmpi eq, %arg1, %c0_i32_8 : i32
    %10 = arith.extui %9 : i1 to i32
    %c0_i32_9 = arith.constant 0 : i32
    %11 = arith.cmpi ne, %10, %c0_i32_9 : i32
    scf.if %11 {
      %c0_10 = arith.constant 0 : index
      %c0_11 = arith.constant 0 : index
      %12 = vector.load %arg5[%c0_10, %c0_11] : memref<128x128xf32, #tpu.memory_space<vmem>>, vector<128x128xf32>
      %13 = arith.truncf %12 : vector<128x128xf32> to vector<128x128xbf16>
      %c0_12 = arith.constant 0 : index
      %c0_13 = arith.constant 0 : index
      %14 = vector.load %arg4[%c0_12, %c0_13] : memref<128x128xbf16, #tpu.memory_space<vmem>>, vector<128x128xbf16>
      tpu.vector_store %arg4[%c0_12, %c0_13], %13 {strides = array<i32>} : memref<128x128xbf16, #tpu.memory_space<vmem>>, vector<128x128xbf16>,
    } else {
    }
    return
  }
  func.func @transform_0(%arg0: i32, %arg1: i32) -> (i32, i32) {
    %c0_i32 = arith.constant 0 : i32
    return %arg0, %arg1 : i32, i32
  }
  func.func @transform_1(%arg0: i32, %arg1: i32) -> (i32, i32) {
    %c0_i32 = arith.constant 0 : i32
    %c0_i32_0 = arith.constant 0 : i32
    return %arg1, %c0_i32 : i32, i32
  }
  func.func @transform_2(%arg0: i32, %arg1: i32) -> (i32, i32) {
    %c0_i32 = arith.constant 0 : i32
    %c0_i32_0 = arith.constant 0 : i32
    return %arg0, %c0_i32 : i32, i32
  }
}

module attributes {stable_mosaic.version = 11 : i64} {
  func.func @prop_head_wc_kernel(%arg0: i32, %arg1: i32, %arg2: memref<128x128xbf16, #tpu.memory_space<vmem>>, %arg3: memref<128x128xbf16, #tpu.memory_space<vmem>>, %arg4: memref<128x128xbf16, #tpu.memory_space<vmem>>, %arg5: memref<1x128xf32, #tpu.memory_space<vmem>>, %arg6: memref<128x128xbf16, #tpu.memory_space<vmem>>, %arg7: memref<1x128xf32, #tpu.memory_space<vmem>>, %arg8: memref<128x128xf32, #tpu.memory_space<vmem>>, %arg9: memref<128x128xf32, #tpu.memory_space<vmem>>) attributes {dimension_semantics = [#tpu.dimension_semantics<parallel>, #tpu.dimension_semantics<arbitrary>], iteration_bounds = array<i64: 1, 1>, scalar_prefetch = 0 : i64, scratch_operands = 1 : i64, tpu.core_type = #tpu.core_type<tc>, window_params = [{transform_indices = @transform_0, window_bounds = array<i64: 128, 128>}, {transform_indices = @transform_1, window_bounds = array<i64: 128, 128>}, {pipeline_mode = #tpu.pipeline_mode<synchronous>, transform_indices = @transform_2, window_bounds = array<i64: 128, 128>}, {pipeline_mode = #tpu.pipeline_mode<synchronous>, transform_indices = @transform_3, window_bounds = array<i64: 1, 128>}, {pipeline_mode = #tpu.pipeline_mode<synchronous>, transform_indices = @transform_4, window_bounds = array<i64: 128, 128>}, {pipeline_mode = #tpu.pipeline_mode<synchronous>, transform_indices = @transform_5, window_bounds = array<i64: 1, 128>}, {transform_indices = @transform_6, window_bounds = array<i64: 128, 128>}]} {
    %c0_i32 = arith.constant 0 : i32
    %0 = arith.cmpi eq, %arg1, %c0_i32 : i32
    %1 = arith.extui %0 : i1 to i32
    %c0_i32_0 = arith.constant 0 : i32
    %2 = arith.cmpi ne, %1, %c0_i32_0 : i32
    scf.if %2 {
      %cst_10 = arith.constant 0.000000e+00 : f32
      %12 = vector.broadcast %cst_10 : f32 to vector<128x128xf32>
      %c0_11 = arith.constant 0 : index
      %c0_12 = arith.constant 0 : index
      %13 = vector.load %arg9[%c0_11, %c0_12] : memref<128x128xf32, #tpu.memory_space<vmem>>, vector<128x128xf32>
      tpu.vector_store %arg9[%c0_11, %c0_12], %12 {strides = array<i32>} : memref<128x128xf32, #tpu.memory_space<vmem>>, vector<128x128xf32>,
    } else {
    }
    %c0 = arith.constant 0 : index
    %c0_1 = arith.constant 0 : index
    %3 = vector.load %arg9[%c0, %c0_1] : memref<128x128xf32, #tpu.memory_space<vmem>>, vector<128x128xf32>
    %c0_2 = arith.constant 0 : index
    %c0_3 = arith.constant 0 : index
    %4 = vector.load %arg2[%c0_2, %c0_3] : memref<128x128xbf16, #tpu.memory_space<vmem>>, vector<128x128xbf16>
    %c0_4 = arith.constant 0 : index
    %c0_5 = arith.constant 0 : index
    %5 = vector.load %arg3[%c0_4, %c0_5] : memref<128x128xbf16, #tpu.memory_space<vmem>>, vector<128x128xbf16>
    %cst = arith.constant dense<0.000000e+00> : vector<128x128xf32>
    %6 = tpu.matmul %4, %5, %cst {dimension_numbers = #tpu.dot_dimension_numbers<[1], [0], [0], [1], [0, 0, 1, 1], [], []>} : vector<128x128xbf16>, vector<128x128xbf16>, vector<128x128xf32> -> vector<128x128xf32>
    %7 = arith.addf %3, %6 : vector<128x128xf32>
    %c0_6 = arith.constant 0 : index
    %c0_7 = arith.constant 0 : index
    %8 = vector.load %arg9[%c0_6, %c0_7] : memref<128x128xf32, #tpu.memory_space<vmem>>, vector<128x128xf32>
    tpu.vector_store %arg9[%c0_6, %c0_7], %7 {strides = array<i32>} : memref<128x128xf32, #tpu.memory_space<vmem>>, vector<128x128xf32>,
    %c0_i32_8 = arith.constant 0 : i32
    %9 = arith.cmpi eq, %arg1, %c0_i32_8 : i32
    %10 = arith.extui %9 : i1 to i32
    %c0_i32_9 = arith.constant 0 : i32
    %11 = arith.cmpi ne, %10, %c0_i32_9 : i32
    scf.if %11 {
      %c0_10 = arith.constant 0 : index
      %c0_11 = arith.constant 0 : index
      %12 = vector.load %arg9[%c0_10, %c0_11] : memref<128x128xf32, #tpu.memory_space<vmem>>, vector<128x128xf32>
      %13 = arith.truncf %12 : vector<128x128xf32> to vector<128x128xbf16>
      %c0_12 = arith.constant 0 : index
      %c0_13 = arith.constant 0 : index
      %14 = vector.load %arg4[%c0_12, %c0_13] : memref<128x128xbf16, #tpu.memory_space<vmem>>, vector<128x128xbf16>
      %cst_14 = arith.constant dense<0.000000e+00> : vector<128x128xf32>
      %15 = tpu.matmul %13, %14, %cst_14 {dimension_numbers = #tpu.dot_dimension_numbers<[1], [0], [0], [1], [0, 0, 1, 1], [], []>} : vector<128x128xbf16>, vector<128x128xbf16>, vector<128x128xf32> -> vector<128x128xf32>
      %c0_15 = arith.constant 0 : index
      %c0_16 = arith.constant 0 : index
      %16 = vector.load %arg5[%c0_15, %c0_16] : memref<1x128xf32, #tpu.memory_space<vmem>>, vector<1x128xf32>
      %17 = vector.broadcast %16 : vector<1x128xf32> to vector<128x128xf32>
      %18 = arith.addf %15, %17 : vector<128x128xf32>
      %cst_17 = arith.constant 0.000000e+00 : f32
      %19 = vector.broadcast %cst_17 : f32 to vector<128x128xf32>
      %20 = arith.maximumf %18, %19 : vector<128x128xf32>
      %21 = arith.truncf %20 : vector<128x128xf32> to vector<128x128xbf16>
      %c0_18 = arith.constant 0 : index
      %c0_19 = arith.constant 0 : index
      %22 = vector.load %arg6[%c0_18, %c0_19] : memref<128x128xbf16, #tpu.memory_space<vmem>>, vector<128x128xbf16>
      %cst_20 = arith.constant dense<0.000000e+00> : vector<128x128xf32>
      %23 = tpu.matmul %21, %22, %cst_20 {dimension_numbers = #tpu.dot_dimension_numbers<[1], [0], [0], [1], [0, 0, 1, 1], [], []>} : vector<128x128xbf16>, vector<128x128xbf16>, vector<128x128xf32> -> vector<128x128xf32>
      %c0_21 = arith.constant 0 : index
      %c0_22 = arith.constant 0 : index
      %24 = vector.load %arg7[%c0_21, %c0_22] : memref<1x128xf32, #tpu.memory_space<vmem>>, vector<1x128xf32>
      %25 = vector.broadcast %24 : vector<1x128xf32> to vector<128x128xf32>
      %26 = arith.addf %23, %25 : vector<128x128xf32>
      %c0_23 = arith.constant 0 : index
      %c0_24 = arith.constant 0 : index
      %27 = vector.load %arg8[%c0_23, %c0_24] : memref<128x128xf32, #tpu.memory_space<vmem>>, vector<128x128xf32>
      tpu.vector_store %arg8[%c0_23, %c0_24], %26 {strides = array<i32>} : memref<128x128xf32, #tpu.memory_space<vmem>>, vector<128x128xf32>,
    } else {
    }
    return
  }
  func.func @transform_0(%arg0: i32, %arg1: i32) -> (i32, i32) {
    %c0_i32 = arith.constant 0 : i32
    return %arg0, %arg1 : i32, i32
  }
  func.func @transform_1(%arg0: i32, %arg1: i32) -> (i32, i32) {
    %c0_i32 = arith.constant 0 : i32
    %c0_i32_0 = arith.constant 0 : i32
    return %arg1, %c0_i32 : i32, i32
  }
  func.func @transform_2(%arg0: i32, %arg1: i32) -> (i32, i32) {
    %c0_i32 = arith.constant 0 : i32
    %c0_i32_0 = arith.constant 0 : i32
    %c0_i32_1 = arith.constant 0 : i32
    return %c0_i32, %c0_i32_0 : i32, i32
  }
  func.func @transform_3(%arg0: i32, %arg1: i32) -> (i32, i32) {
    %c0_i32 = arith.constant 0 : i32
    %c0_i32_0 = arith.constant 0 : i32
    %c0_i32_1 = arith.constant 0 : i32
    return %c0_i32, %c0_i32_0 : i32, i32
  }
  func.func @transform_4(%arg0: i32, %arg1: i32) -> (i32, i32) {
    %c0_i32 = arith.constant 0 : i32
    %c0_i32_0 = arith.constant 0 : i32
    %c0_i32_1 = arith.constant 0 : i32
    return %c0_i32, %c0_i32_0 : i32, i32
  }
  func.func @transform_5(%arg0: i32, %arg1: i32) -> (i32, i32) {
    %c0_i32 = arith.constant 0 : i32
    %c0_i32_0 = arith.constant 0 : i32
    %c0_i32_1 = arith.constant 0 : i32
    return %c0_i32, %c0_i32_0 : i32, i32
  }
  func.func @transform_6(%arg0: i32, %arg1: i32) -> (i32, i32) {
    %c0_i32 = arith.constant 0 : i32
    %c0_i32_0 = arith.constant 0 : i32
    return %arg0, %c0_i32 : i32, i32
  }
}

</mosaic_0001>

<llo_original>
// kernel: sgc2_forward.2
$region0: #{sgc2_forward.2}
  #allocation0 [shape = 'u32[]', space=smem, size = 0x4, offset = 0x4, fixed_abs, tag = 'smem constant byte address 0x4 - core index']
  #allocation1 [shape = 'u32[72,128]{1,0:T(1,128)}', space=vmem, size = 0x9000, scoped, tag = 'internal scratch']
  #allocation2 [shape = 'f32[128,128]{1,0:T(8,128)}', space=vmem, size = 0x10000, scoped, tag = 'scratch operand']
  %s0 = inlined_call_operand.vmem [shape: bf16[128,128], index: 0, kind: input, shape index: {}]
  %s1 = inlined_call_operand.vmem [shape: bf16[128,128], index: 1, kind: input, shape index: {}]
  %s2 = inlined_call_operand.vmem [shape: bf16[128,128], index: 2, kind: output, shape index: {}]
  %s3 = sld [smem:[#allocation0]]
  $region26: #{sgc2_forward.2} parent=0
    _
  %s5 = ssub.s32 1, %s3
  %s6 = scalar_select 0, %s5, %s3
  // Predicated region
  $region2: #{sgc2_forward.2} parent=0 // pred_check
    _
  $region3: #{sgc2_forward.2} parent=0 // pred_check_branch
    %8 = sbr.rel (0) target = $region5
  $region4: #{sgc2_forward.2} parent=0 // pred_region
    _
  $region5: #{sgc2_forward.2} parent=0 // pred_fallthru
    _
  // Predicated region
  $region6: #{sgc2_forward.2} parent=0 // pred_check
    _
  $region7: #{sgc2_forward.2} parent=0 // pred_check_branch
    %10 = sbr.rel (0) target = $region9
  $region8: #{sgc2_forward.2} parent=0 // pred_region
    _
  $region9: #{sgc2_forward.2} parent=0 // pred_fallthru
    _
  %p11 = scmp.eq.s32.totalorder 0, 0
  // Predicated region
  $region10: #{sgc2_forward.2} parent=0 // pred_check
    %p12 = pneg %p11
  $region11: #{sgc2_forward.2} parent=0 // pred_check_branch
    %14 = sbr.rel (%p12) target = $region13
  $region12: #{sgc2_forward.2} parent=0 // pred_region
    %15 = vst [vmem:[#allocation2] sm:$0xff] 0.0
    %16 = vst [vmem:[#allocation2 + $0x8] sm:$0xff] 0.0
    %17 = vst [vmem:[#allocation2 + $0x10] sm:$0xff] 0.0
    %18 = vst [vmem:[#allocation2 + $0x18] sm:$0xff] 0.0
    %19 = vst [vmem:[#allocation2 + $0x20] sm:$0xff] 0.0
    %20 = vst [vmem:[#allocation2 + $0x28] sm:$0xff] 0.0
    %21 = vst [vmem:[#allocation2 + $0x30] sm:$0xff] 0.0
    %22 = vst [vmem:[#allocation2 + $0x38] sm:$0xff] 0.0
    %23 = vst [vmem:[#allocation2 + $0x40] sm:$0xff] 0.0
    %24 = vst [vmem:[#allocation2 + $0x48] sm:$0xff] 0.0
    %25 = vst [vmem:[#allocation2 + $0x50] sm:$0xff] 0.0
    %26 = vst [vmem:[#allocation2 + $0x58] sm:$0xff] 0.0
    %27 = vst [vmem:[#allocation2 + $0x60] sm:$0xff] 0.0
    %28 = vst [vmem:[#allocation2 + $0x68] sm:$0xff] 0.0
    %29 = vst [vmem:[#allocation2 + $0x70] sm:$0xff] 0.0
    %30 = vst [vmem:[#allocation2 + $0x78] sm:$0xff] 0.0
  $region13: #{sgc2_forward.2} parent=0 // pred_fallthru
    _
  %v31 = vld [vmem:[#allocation2] sm:$0xff]
  %v32 = vld [vmem:[#allocation2 + $0x8] sm:$0xff]
  %v33 = vld [vmem:[#allocation2 + $0x10] sm:$0xff]
  %v34 = vld [vmem:[#allocation2 + $0x18] sm:$0xff]
  %v35 = vld [vmem:[#allocation2 + $0x20] sm:$0xff]
  %v36 = vld [vmem:[#allocation2 + $0x28] sm:$0xff]
  %v37 = vld [vmem:[#allocation2 + $0x30] sm:$0xff]
  %v38 = vld [vmem:[#allocation2 + $0x38] sm:$0xff]
  %v39 = vld [vmem:[#allocation2 + $0x40] sm:$0xff]
  %v40 = vld [vmem:[#allocation2 + $0x48] sm:$0xff]
  %v41 = vld [vmem:[#allocation2 + $0x50] sm:$0xff]
  %v42 = vld [vmem:[#allocation2 + $0x58] sm:$0xff]
  %v43 = vld [vmem:[#allocation2 + $0x60] sm:$0xff]
  %v44 = vld [vmem:[#allocation2 + $0x68] sm:$0xff]
  %v45 = vld [vmem:[#allocation2 + $0x70] sm:$0xff]
  %v46 = vld [vmem:[#allocation2 + $0x78] sm:$0xff]
  %v47 = vld [vmem:[%s0] sm:$0xf]
  %v48 = vld [vmem:[%s0 + $0x4] sm:$0xf]
  %v49 = vld [vmem:[%s0 + $0x8] sm:$0xf]
  %v50 = vld [vmem:[%s0 + $0xc] sm:$0xf]
  %v51 = vld [vmem:[%s0 + $0x10] sm:$0xf]
  %v52 = vld [vmem:[%s0 + $0x14] sm:$0xf]
  %v53 = vld [vmem:[%s0 + $0x18] sm:$0xf]
  %v54 = vld [vmem:[%s0 + $0x1c] sm:$0xf]
  %v55 = vld [vmem:[%s0 + $0x20] sm:$0xf]
  %v56 = vld [vmem:[%s0 + $0x24] sm:$0xf]
  %v57 = vld [vmem:[%s0 + $0x28] sm:$0xf]
  %v58 = vld [vmem:[%s0 + $0x2c] sm:$0xf]
  %v59 = vld [vmem:[%s0 + $0x30] sm:$0xf]
  %v60 = vld [vmem:[%s0 + $0x34] sm:$0xf]
  %v61 = vld [vmem:[%s0 + $0x38] sm:$0xf]
  %v62 = vld [vmem:[%s0 + $0x3c] sm:$0xf]
  %v63 = vld [vmem:[%s1] sm:$0xf]
  %v64 = vld [vmem:[%s1 + $0x4] sm:$0xf]
  %v65 = vld [vmem:[%s1 + $0x8] sm:$0xf]
  %v66 = vld [vmem:[%s1 + $0xc] sm:$0xf]
  %v67 = vld [vmem:[%s1 + $0x10] sm:$0xf]
  %v68 = vld [vmem:[%s1 + $0x14] sm:$0xf]
  %v69 = vld [vmem:[%s1 + $0x18] sm:$0xf]
  %v70 = vld [vmem:[%s1 + $0x1c] sm:$0xf]
  %v71 = vld [vmem:[%s1 + $0x20] sm:$0xf]
  %v72 = vld [vmem:[%s1 + $0x24] sm:$0xf]
  %v73 = vld [vmem:[%s1 + $0x28] sm:$0xf]
  %v74 = vld [vmem:[%s1 + $0x2c] sm:$0xf]
  %v75 = vld [vmem:[%s1 + $0x30] sm:$0xf]
  %v76 = vld [vmem:[%s1 + $0x34] sm:$0xf]
  %v77 = vld [vmem:[%s1 + $0x38] sm:$0xf]
  %v78 = vld [vmem:[%s1 + $0x3c] sm:$0xf]
  %v95 = vunpack.c.l.b16 %v47
  %v96 = vunpack.c.l.b16 %v48
  %v97 = vunpack.c.l.b16 %v49
  %v98 = vunpack.c.l.b16 %v50
  %v99 = vunpack.c.l.b16 %v51
  %v100 = vunpack.c.l.b16 %v52
  %v101 = vunpack.c.l.b16 %v53
  %v102 = vunpack.c.l.b16 %v54
  %v103 = vunpack.c.l.b16 %v55
  %v104 = vunpack.c.l.b16 %v56
  %v105 = vunpack.c.l.b16 %v57
  %v106 = vunpack.c.l.b16 %v58
  %v107 = vunpack.c.l.b16 %v59
  %v108 = vunpack.c.l.b16 %v60
  %v109 = vunpack.c.l.b16 %v61
  %v110 = vunpack.c.l.b16 %v62
  %v111 = vpack.c.b16 %v96, %v95
  %v112 = vpack.c.b16 %v98, %v97
  %v113 = vpack.c.b16 %v100, %v99
  %v114 = vpack.c.b16 %v102, %v101
  %v115 = vpack.c.b16 %v104, %v103
  %v116 = vpack.c.b16 %v106, %v105
  %v117 = vpack.c.b16 %v108, %v107
  %v118 = vpack.c.b16 %v110, %v109
  %v143 = vunpack.c.l.b16 %v63
  %v144 = vunpack.c.l.b16 %v64
  %v145 = vunpack.c.l.b16 %v65
  %v146 = vunpack.c.l.b16 %v66
  %v147 = vunpack.c.l.b16 %v67
  %v148 = vunpack.c.l.b16 %v68
  %v149 = vunpack.c.l.b16 %v69
  %v150 = vunpack.c.l.b16 %v70
  %v151 = vunpack.c.l.b16 %v71
  %v152 = vunpack.c.l.b16 %v72
  %v153 = vunpack.c.l.b16 %v73
  %v154 = vunpack.c.l.b16 %v74
  %v155 = vunpack.c.l.b16 %v75
  %v156 = vunpack.c.l.b16 %v76
  %v157 = vunpack.c.l.b16 %v77
  %v158 = vunpack.c.l.b16 %v78
  %v159 = vpack.c.b16 %v144, %v143
  %v160 = vpack.c.b16 %v146, %v145
  %v161 = vpack.c.b16 %v148, %v147
  %v162 = vpack.c.b16 %v150, %v149
  %v163 = vpack.c.b16 %v152, %v151
  %v164 = vpack.c.b16 %v154, %v153
  %v165 = vpack.c.b16 %v156, %v155
  %v166 = vpack.c.b16 %v158, %v157
  %175 = vmatpush.bf16.msra.mxu0 %v166
  %176 = vmatpush.bf16.msra.mxu0 %v165
  %177 = vmatpush.bf16.msra.mxu0 %v164
  %178 = vmatpush.bf16.msra.mxu0 %v163
  %179 = vmatpush.bf16.msra.mxu0 %v162
  %180 = vmatpush.bf16.msra.mxu0 %v161
  %181 = vmatpush.bf16.msra.mxu0 %v160
  %182 = vmatpush.bf16.msra.mxu0 %v159
  %183 = vmatmul.bf16.gmra.mxu0 %v111
  %v184 = vpop.f32.mrf.mxu0
  %v185 = vadd.f32 0.0, %v184
  %v186 = vpop.f32.mrf.mxu0
  %v187 = vadd.f32 0.0, %v186
  %188 = vmatmul.bf16.gmra.mxu0 %v112
  %v189 = vpop.f32.mrf.mxu0
  %v190 = vadd.f32 0.0, %v189
  %v191 = vpop.f32.mrf.mxu0
  %v192 = vadd.f32 0.0, %v191
  %193 = vmatmul.bf16.gmra.mxu0 %v113
  %v194 = vpop.f32.mrf.mxu0
  %v195 = vadd.f32 0.0, %v194
  %v196 = vpop.f32.mrf.mxu0
  %v197 = vadd.f32 0.0, %v196
  %198 = vmatmul.bf16.gmra.mxu0 %v114
  %v199 = vpop.f32.mrf.mxu0
  %v200 = vadd.f32 0.0, %v199
  %v201 = vpop.f32.mrf.mxu0
  %v202 = vadd.f32 0.0, %v201
  %203 = vmatmul.bf16.gmra.mxu0 %v115
  %v204 = vpop.f32.mrf.mxu0
  %v205 = vadd.f32 0.0, %v204
  %v206 = vpop.f32.mrf.mxu0
  %v207 = vadd.f32 0.0, %v206
  %208 = vmatmul.bf16.gmra.mxu0 %v116
  %v209 = vpop.f32.mrf.mxu0
  %v210 = vadd.f32 0.0, %v209
  %v211 = vpop.f32.mrf.mxu0
  %v212 = vadd.f32 0.0, %v211
  %213 = vmatmul.bf16.gmra.mxu0 %v117
  %v214 = vpop.f32.mrf.mxu0
  %v215 = vadd.f32 0.0, %v214
  %v216 = vpop.f32.mrf.mxu0
  %v217 = vadd.f32 0.0, %v216
  %218 = vmatmul.bf16.gmra.mxu0 %v118
  %v219 = vpop.f32.mrf.mxu0
  %v220 = vadd.f32 0.0, %v219
  %v221 = vpop.f32.mrf.mxu0
  %v222 = vadd.f32 0.0, %v221
  %223 = vdwg.mxu0
  %v224 = vadd.f32 %v31, %v185
  %v225 = vadd.f32 %v32, %v187
  %v226 = vadd.f32 %v33, %v190
  %v227 = vadd.f32 %v34, %v192
  %v228 = vadd.f32 %v35, %v195
  %v229 = vadd.f32 %v36, %v197
  %v230 = vadd.f32 %v37, %v200
  %v231 = vadd.f32 %v38, %v202
  %v232 = vadd.f32 %v39, %v205
  %v233 = vadd.f32 %v40, %v207
  %v234 = vadd.f32 %v41, %v210
  %v235 = vadd.f32 %v42, %v212
  %v236 = vadd.f32 %v43, %v215
  %v237 = vadd.f32 %v44, %v217
  %v238 = vadd.f32 %v45, %v220
  %v239 = vadd.f32 %v46, %v222
  %240 = vst [vmem:[#allocation2] sm:$0xff] %v224
  %241 = vst [vmem:[#allocation2 + $0x8] sm:$0xff] %v225
  %242 = vst [vmem:[#allocation2 + $0x10] sm:$0xff] %v226
  %243 = vst [vmem:[#allocation2 + $0x18] sm:$0xff] %v227
  %244 = vst [vmem:[#allocation2 + $0x20] sm:$0xff] %v228
  %245 = vst [vmem:[#allocation2 + $0x28] sm:$0xff] %v229
  %246 = vst [vmem:[#allocation2 + $0x30] sm:$0xff] %v230
  %247 = vst [vmem:[#allocation2 + $0x38] sm:$0xff] %v231
  %248 = vst [vmem:[#allocation2 + $0x40] sm:$0xff] %v232
  %249 = vst [vmem:[#allocation2 + $0x48] sm:$0xff] %v233
  %250 = vst [vmem:[#allocation2 + $0x50] sm:$0xff] %v234
  %251 = vst [vmem:[#allocation2 + $0x58] sm:$0xff] %v235
  %252 = vst [vmem:[#allocation2 + $0x60] sm:$0xff] %v236
  %253 = vst [vmem:[#allocation2 + $0x68] sm:$0xff] %v237
  %254 = vst [vmem:[#allocation2 + $0x70] sm:$0xff] %v238
  %255 = vst [vmem:[#allocation2 + $0x78] sm:$0xff] %v239
  // Predicated region
  $region14: #{sgc2_forward.2} parent=0 // pred_check
    %p256 = pneg %p11
  $region15: #{sgc2_forward.2} parent=0 // pred_check_branch
    %258 = sbr.rel (%p256) target = $region17
  $region16: #{sgc2_forward.2} parent=0 // pred_region
    %v259 = vld [vmem:[#allocation2] sm:$0xff]
    %v260 = vld [vmem:[#allocation2 + $0x8] sm:$0xff]
    %v261 = vld [vmem:[#allocation2 + $0x10] sm:$0xff]
    %v262 = vld [vmem:[#allocation2 + $0x18] sm:$0xff]
    %v263 = vld [vmem:[#allocation2 + $0x20] sm:$0xff]
    %v264 = vld [vmem:[#allocation2 + $0x28] sm:$0xff]
    %v265 = vld [vmem:[#allocation2 + $0x30] sm:$0xff]
    %v266 = vld [vmem:[#allocation2 + $0x38] sm:$0xff]
    %v267 = vld [vmem:[#allocation2 + $0x40] sm:$0xff]
    %v268 = vld [vmem:[#allocation2 + $0x48] sm:$0xff]
    %v269 = vld [vmem:[#allocation2 + $0x50] sm:$0xff]
    %v270 = vld [vmem:[#allocation2 + $0x58] sm:$0xff]
    %v271 = vld [vmem:[#allocation2 + $0x60] sm:$0xff]
    %v272 = vld [vmem:[#allocation2 + $0x68] sm:$0xff]
    %v273 = vld [vmem:[#allocation2 + $0x70] sm:$0xff]
    %v274 = vld [vmem:[#allocation2 + $0x78] sm:$0xff]
    %v275 = vpack.c.bf16 %v259, %v259
    %v276 = vpack.c.bf16 %v260, %v260
    %v277 = vpack.c.bf16 %v261, %v261
    %v278 = vpack.c.bf16 %v262, %v262
    %v279 = vpack.c.bf16 %v263, %v263
    %v280 = vpack.c.bf16 %v264, %v264
    %v281 = vpack.c.bf16 %v265, %v265
    %v282 = vpack.c.bf16 %v266, %v266
    %v283 = vpack.c.bf16 %v267, %v267
    %v284 = vpack.c.bf16 %v268, %v268
    %v285 = vpack.c.bf16 %v269, %v269
    %v286 = vpack.c.bf16 %v270, %v270
    %v287 = vpack.c.bf16 %v271, %v271
    %v288 = vpack.c.bf16 %v272, %v272
    %v289 = vpack.c.bf16 %v273, %v273
    %v290 = vpack.c.bf16 %v274, %v274
    %291 = vst [vmem:[%s2] sm:$0xf] %v275
    %292 = vst [vmem:[%s2 + $0x4] sm:$0xf] %v276
    %293 = vst [vmem:[%s2 + $0x8] sm:$0xf] %v277
    %294 = vst [vmem:[%s2 + $0xc] sm:$0xf] %v278
    %295 = vst [vmem:[%s2 + $0x10] sm:$0xf] %v279
    %296 = vst [vmem:[%s2 + $0x14] sm:$0xf] %v280
    %297 = vst [vmem:[%s2 + $0x18] sm:$0xf] %v281
    %298 = vst [vmem:[%s2 + $0x1c] sm:$0xf] %v282
    %299 = vst [vmem:[%s2 + $0x20] sm:$0xf] %v283
    %300 = vst [vmem:[%s2 + $0x24] sm:$0xf] %v284
    %301 = vst [vmem:[%s2 + $0x28] sm:$0xf] %v285
    %302 = vst [vmem:[%s2 + $0x2c] sm:$0xf] %v286
    %303 = vst [vmem:[%s2 + $0x30] sm:$0xf] %v287
    %304 = vst [vmem:[%s2 + $0x34] sm:$0xf] %v288
    %305 = vst [vmem:[%s2 + $0x38] sm:$0xf] %v289
    %306 = vst [vmem:[%s2 + $0x3c] sm:$0xf] %v290
  $region17: #{sgc2_forward.2} parent=0 // pred_fallthru
    _
  // Predicated region
  $region18: #{sgc2_forward.2} parent=0 // pred_check
    _
  $region19: #{sgc2_forward.2} parent=0 // pred_check_branch
    %308 = sbr.rel (0) target = $region21
  $region20: #{sgc2_forward.2} parent=0 // pred_region
    _
  $region21: #{sgc2_forward.2} parent=0 // pred_fallthru
    _
  // Predicated region
  $region22: #{sgc2_forward.2} parent=0 // pred_check
    _
  $region23: #{sgc2_forward.2} parent=0 // pred_check_branch
    %310 = sbr.rel (0) target = $region25
  $region24: #{sgc2_forward.2} parent=0 // pred_region
    _
  $region25: #{sgc2_forward.2} parent=0 // pred_fallthru
    _

// kernel: sgc2_forward.3
$region0: #{sgc2_forward.3}
  #allocation0 [shape = 'u32[]', space=smem, size = 0x4, offset = 0x4, fixed_abs, tag = 'smem constant byte address 0x4 - core index']
  #allocation1 [shape = 'u32[72,128]{1,0:T(1,128)}', space=vmem, size = 0x9000, scoped, tag = 'internal scratch']
  #allocation2 [shape = 'f32[128,128]{1,0:T(8,128)}', space=vmem, size = 0x10000, scoped, tag = 'scratch operand']
  %s0 = inlined_call_operand.vmem [shape: bf16[128,128], index: 0, kind: input, shape index: {}]
  %s1 = inlined_call_operand.vmem [shape: bf16[128,128], index: 1, kind: input, shape index: {}]
  %s2 = inlined_call_operand.vmem [shape: bf16[128,128], index: 2, kind: input, shape index: {}]
  %s3 = inlined_call_operand.vmem [shape: f32[1,128], index: 3, kind: input, shape index: {}]
  %s4 = inlined_call_operand.vmem [shape: bf16[128,128], index: 4, kind: input, shape index: {}]
  %s5 = inlined_call_operand.vmem [shape: f32[1,128], index: 5, kind: input, shape index: {}]
  %s6 = inlined_call_operand.vmem [shape: f32[128,128], index: 6, kind: output, shape index: {}]
  %s7 = sld [smem:[#allocation0]]
  $region42: #{sgc2_forward.3} parent=0
    _
  %s9 = ssub.s32 1, %s7
  %s10 = scalar_select 0, %s9, %s7
  // Predicated region
  $region2: #{sgc2_forward.3} parent=0 // pred_check
    _
  $region3: #{sgc2_forward.3} parent=0 // pred_check_branch
    %12 = sbr.rel (0) target = $region5
  $region4: #{sgc2_forward.3} parent=0 // pred_region
    _
  $region5: #{sgc2_forward.3} parent=0 // pred_fallthru
    _
  // Predicated region
  $region6: #{sgc2_forward.3} parent=0 // pred_check
    _
  $region7: #{sgc2_forward.3} parent=0 // pred_check_branch
    %14 = sbr.rel (0) target = $region9
  $region8: #{sgc2_forward.3} parent=0 // pred_region
    _
  $region9: #{sgc2_forward.3} parent=0 // pred_fallthru
    _
  // Predicated region
  $region10: #{sgc2_forward.3} parent=0 // pred_check
    _
  $region11: #{sgc2_forward.3} parent=0 // pred_check_branch
    %16 = sbr.rel (0) target = $region13
  $region12: #{sgc2_forward.3} parent=0 // pred_region
    _
  $region13: #{sgc2_forward.3} parent=0 // pred_fallthru
    _
  // Predicated region
  $region14: #{sgc2_forward.3} parent=0 // pred_check
    _
  $region15: #{sgc2_forward.3} parent=0 // pred_check_branch
    %18 = sbr.rel (0) target = $region17
  $region16: #{sgc2_forward.3} parent=0 // pred_region
    _
  $region17: #{sgc2_forward.3} parent=0 // pred_fallthru
    _
  // Predicated region
  $region18: #{sgc2_forward.3} parent=0 // pred_check
    _
  $region19: #{sgc2_forward.3} parent=0 // pred_check_branch
    %20 = sbr.rel (0) target = $region21
  $region20: #{sgc2_forward.3} parent=0 // pred_region
    _
  $region21: #{sgc2_forward.3} parent=0 // pred_fallthru
    _
  // Predicated region
  $region22: #{sgc2_forward.3} parent=0 // pred_check
    _
  $region23: #{sgc2_forward.3} parent=0 // pred_check_branch
    %22 = sbr.rel (0) target = $region25
  $region24: #{sgc2_forward.3} parent=0 // pred_region
    _
  $region25: #{sgc2_forward.3} parent=0 // pred_fallthru
    _
  %p23 = scmp.eq.s32.totalorder 0, 0
  // Predicated region
  $region26: #{sgc2_forward.3} parent=0 // pred_check
    %p24 = pneg %p23
  $region27: #{sgc2_forward.3} parent=0 // pred_check_branch
    %26 = sbr.rel (%p24) target = $region29
  $region28: #{sgc2_forward.3} parent=0 // pred_region
    %27 = vst [vmem:[#allocation2] sm:$0xff] 0.0
    %28 = vst [vmem:[#allocation2 + $0x8] sm:$0xff] 0.0
    %29 = vst [vmem:[#allocation2 + $0x10] sm:$0xff] 0.0
    %30 = vst [vmem:[#allocation2 + $0x18] sm:$0xff] 0.0
    %31 = vst [vmem:[#allocation2 + $0x20] sm:$0xff] 0.0
    %32 = vst [vmem:[#allocation2 + $0x28] sm:$0xff] 0.0
    %33 = vst [vmem:[#allocation2 + $0x30] sm:$0xff] 0.0
    %34 = vst [vmem:[#allocation2 + $0x38] sm:$0xff] 0.0
    %35 = vst [vmem:[#allocation2 + $0x40] sm:$0xff] 0.0
    %36 = vst [vmem:[#allocation2 + $0x48] sm:$0xff] 0.0
    %37 = vst [vmem:[#allocation2 + $0x50] sm:$0xff] 0.0
    %38 = vst [vmem:[#allocation2 + $0x58] sm:$0xff] 0.0
    %39 = vst [vmem:[#allocation2 + $0x60] sm:$0xff] 0.0
    %40 = vst [vmem:[#allocation2 + $0x68] sm:$0xff] 0.0
    %41 = vst [vmem:[#allocation2 + $0x70] sm:$0xff] 0.0
    %42 = vst [vmem:[#allocation2 + $0x78] sm:$0xff] 0.0
  $region29: #{sgc2_forward.3} parent=0 // pred_fallthru
    _
  %v43 = vld [vmem:[#allocation2] sm:$0xff]
  %v44 = vld [vmem:[#allocation2 + $0x8] sm:$0xff]
  %v45 = vld [vmem:[#allocation2 + $0x10] sm:$0xff]
  %v46 = vld [vmem:[#allocation2 + $0x18] sm:$0xff]
  %v47 = vld [vmem:[#allocation2 + $0x20] sm:$0xff]
  %v48 = vld [vmem:[#allocation2 + $0x28] sm:$0xff]
  %v49 = vld [vmem:[#allocation2 + $0x30] sm:$0xff]
  %v50 = vld [vmem:[#allocation2 + $0x38] sm:$0xff]
  %v51 = vld [vmem:[#allocation2 + $0x40] sm:$0xff]
  %v52 = vld [vmem:[#allocation2 + $0x48] sm:$0xff]
  %v53 = vld [vmem:[#allocation2 + $0x50] sm:$0xff]
  %v54 = vld [vmem:[#allocation2 + $0x58] sm:$0xff]
  %v55 = vld [vmem:[#allocation2 + $0x60] sm:$0xff]
  %v56 = vld [vmem:[#allocation2 + $0x68] sm:$0xff]
  %v57 = vld [vmem:[#allocation2 + $0x70] sm:$0xff]
  %v58 = vld [vmem:[#allocation2 + $0x78] sm:$0xff]
  %v59 = vld [vmem:[%s0] sm:$0xf]
  %v60 = vld [vmem:[%s0 + $0x4] sm:$0xf]
  %v61 = vld [vmem:[%s0 + $0x8] sm:$0xf]
  %v62 = vld [vmem:[%s0 + $0xc] sm:$0xf]
  %v63 = vld [vmem:[%s0 + $0x10] sm:$0xf]
  %v64 = vld [vmem:[%s0 + $0x14] sm:$0xf]
  %v65 = vld [vmem:[%s0 + $0x18] sm:$0xf]
  %v66 = vld [vmem:[%s0 + $0x1c] sm:$0xf]
  %v67 = vld [vmem:[%s0 + $0x20] sm:$0xf]
  %v68 = vld [vmem:[%s0 + $0x24] sm:$0xf]
  %v69 = vld [vmem:[%s0 + $0x28] sm:$0xf]
  %v70 = vld [vmem:[%s0 + $0x2c] sm:$0xf]
  %v71 = vld [vmem:[%s0 + $0x30] sm:$0xf]
  %v72 = vld [vmem:[%s0 + $0x34] sm:$0xf]
  %v73 = vld [vmem:[%s0 + $0x38] sm:$0xf]
  %v74 = vld [vmem:[%s0 + $0x3c] sm:$0xf]
  %v75 = vld [vmem:[%s1] sm:$0xf]
  %v76 = vld [vmem:[%s1 + $0x4] sm:$0xf]
  %v77 = vld [vmem:[%s1 + $0x8] sm:$0xf]
  %v78 = vld [vmem:[%s1 + $0xc] sm:$0xf]
  %v79 = vld [vmem:[%s1 + $0x10] sm:$0xf]
  %v80 = vld [vmem:[%s1 + $0x14] sm:$0xf]
  %v81 = vld [vmem:[%s1 + $0x18] sm:$0xf]
  %v82 = vld [vmem:[%s1 + $0x1c] sm:$0xf]
  %v83 = vld [vmem:[%s1 + $0x20] sm:$0xf]
  %v84 = vld [vmem:[%s1 + $0x24] sm:$0xf]
  %v85 = vld [vmem:[%s1 + $0x28] sm:$0xf]
  %v86 = vld [vmem:[%s1 + $0x2c] sm:$0xf]
  %v87 = vld [vmem:[%s1 + $0x30] sm:$0xf]
  %v88 = vld [vmem:[%s1 + $0x34] sm:$0xf]
  %v89 = vld [vmem:[%s1 + $0x38] sm:$0xf]
  %v90 = vld [vmem:[%s1 + $0x3c] sm:$0xf]
  %v107 = vunpack.c.l.b16 %v59
  %v108 = vunpack.c.l.b16 %v60
  %v109 = vunpack.c.l.b16 %v61
  %v110 = vunpack.c.l.b16 %v62
  %v111 = vunpack.c.l.b16 %v63
  %v112 = vunpack.c.l.b16 %v64
  %v113 = vunpack.c.l.b16 %v65
  %v114 = vunpack.c.l.b16 %v66
  %v115 = vunpack.c.l.b16 %v67
  %v116 = vunpack.c.l.b16 %v68
  %v117 = vunpack.c.l.b16 %v69
  %v118 = vunpack.c.l.b16 %v70
  %v119 = vunpack.c.l.b16 %v71
  %v120 = vunpack.c.l.b16 %v72
  %v121 = vunpack.c.l.b16 %v73
  %v122 = vunpack.c.l.b16 %v74
  %v123 = vpack.c.b16 %v108, %v107
  %v124 = vpack.c.b16 %v110, %v109
  %v125 = vpack.c.b16 %v112, %v111
  %v126 = vpack.c.b16 %v114, %v113
  %v127 = vpack.c.b16 %v116, %v115
  %v128 = vpack.c.b16 %v118, %v117
  %v129 = vpack.c.b16 %v120, %v119
  %v130 = vpack.c.b16 %v122, %v121
  %v155 = vunpack.c.l.b16 %v75
  %v156 = vunpack.c.l.b16 %v76
  %v157 = vunpack.c.l.b16 %v77
  %v158 = vunpack.c.l.b16 %v78
  %v159 = vunpack.c.l.b16 %v79
  %v160 = vunpack.c.l.b16 %v80
  %v161 = vunpack.c.l.b16 %v81
  %v162 = vunpack.c.l.b16 %v82
  %v163 = vunpack.c.l.b16 %v83
  %v164 = vunpack.c.l.b16 %v84
  %v165 = vunpack.c.l.b16 %v85
  %v166 = vunpack.c.l.b16 %v86
  %v167 = vunpack.c.l.b16 %v87
  %v168 = vunpack.c.l.b16 %v88
  %v169 = vunpack.c.l.b16 %v89
  %v170 = vunpack.c.l.b16 %v90
  %v171 = vpack.c.b16 %v156, %v155
  %v172 = vpack.c.b16 %v158, %v157
  %v173 = vpack.c.b16 %v160, %v159
  %v174 = vpack.c.b16 %v162, %v161
  %v175 = vpack.c.b16 %v164, %v163
  %v176 = vpack.c.b16 %v166, %v165
  %v177 = vpack.c.b16 %v168, %v167
  %v178 = vpack.c.b16 %v170, %v169
  %187 = vmatpush.bf16.msra.mxu0 %v178
  %188 = vmatpush.bf16.msra.mxu0 %v177
  %189 = vmatpush.bf16.msra.mxu0 %v176
  %190 = vmatpush.bf16.msra.mxu0 %v175
  %191 = vmatpush.bf16.msra.mxu0 %v174
  %192 = vmatpush.bf16.msra.mxu0 %v173
  %193 = vmatpush.bf16.msra.mxu0 %v172
  %194 = vmatpush.bf16.msra.mxu0 %v171
  %195 = vmatmul.bf16.gmra.mxu0 %v123
  %v196 = vpop.f32.mrf.mxu0
  %v197 = vadd.f32 0.0, %v196
  %v198 = vpop.f32.mrf.mxu0
  %v199 = vadd.f32 0.0, %v198
  %200 = vmatmul.bf16.gmra.mxu0 %v124
  %v201 = vpop.f32.mrf.mxu0
  %v202 = vadd.f32 0.0, %v201
  %v203 = vpop.f32.mrf.mxu0
  %v204 = vadd.f32 0.0, %v203
  %205 = vmatmul.bf16.gmra.mxu0 %v125
  %v206 = vpop.f32.mrf.mxu0
  %v207 = vadd.f32 0.0, %v206
  %v208 = vpop.f32.mrf.mxu0
  %v209 = vadd.f32 0.0, %v208
  %210 = vmatmul.bf16.gmra.mxu0 %v126
  %v211 = vpop.f32.mrf.mxu0
  %v212 = vadd.f32 0.0, %v211
  %v213 = vpop.f32.mrf.mxu0
  %v214 = vadd.f32 0.0, %v213
  %215 = vmatmul.bf16.gmra.mxu0 %v127
  %v216 = vpop.f32.mrf.mxu0
  %v217 = vadd.f32 0.0, %v216
  %v218 = vpop.f32.mrf.mxu0
  %v219 = vadd.f32 0.0, %v218
  %220 = vmatmul.bf16.gmra.mxu0 %v128
  %v221 = vpop.f32.mrf.mxu0
  %v222 = vadd.f32 0.0, %v221
  %v223 = vpop.f32.mrf.mxu0
  %v224 = vadd.f32 0.0, %v223
  %225 = vmatmul.bf16.gmra.mxu0 %v129
  %v226 = vpop.f32.mrf.mxu0
  %v227 = vadd.f32 0.0, %v226
  %v228 = vpop.f32.mrf.mxu0
  %v229 = vadd.f32 0.0, %v228
  %230 = vmatmul.bf16.gmra.mxu0 %v130
  %v231 = vpop.f32.mrf.mxu0
  %v232 = vadd.f32 0.0, %v231
  %v233 = vpop.f32.mrf.mxu0
  %v234 = vadd.f32 0.0, %v233
  %235 = vdwg.mxu0
  %v236 = vadd.f32 %v43, %v197
  %v237 = vadd.f32 %v44, %v199
  %v238 = vadd.f32 %v45, %v202
  %v239 = vadd.f32 %v46, %v204
  %v240 = vadd.f32 %v47, %v207
  %v241 = vadd.f32 %v48, %v209
  %v242 = vadd.f32 %v49, %v212
  %v243 = vadd.f32 %v50, %v214
  %v244 = vadd.f32 %v51, %v217
  %v245 = vadd.f32 %v52, %v219
  %v246 = vadd.f32 %v53, %v222
  %v247 = vadd.f32 %v54, %v224
  %v248 = vadd.f32 %v55, %v227
  %v249 = vadd.f32 %v56, %v229
  %v250 = vadd.f32 %v57, %v232
  %v251 = vadd.f32 %v58, %v234
  %252 = vst [vmem:[#allocation2] sm:$0xff] %v236
  %253 = vst [vmem:[#allocation2 + $0x8] sm:$0xff] %v237
  %254 = vst [vmem:[#allocation2 + $0x10] sm:$0xff] %v238
  %255 = vst [vmem:[#allocation2 + $0x18] sm:$0xff] %v239
  %256 = vst [vmem:[#allocation2 + $0x20] sm:$0xff] %v240
  %257 = vst [vmem:[#allocation2 + $0x28] sm:$0xff] %v241
  %258 = vst [vmem:[#allocation2 + $0x30] sm:$0xff] %v242
  %259 = vst [vmem:[#allocation2 + $0x38] sm:$0xff] %v243
  %260 = vst [vmem:[#allocation2 + $0x40] sm:$0xff] %v244
  %261 = vst [vmem:[#allocation2 + $0x48] sm:$0xff] %v245
  %262 = vst [vmem:[#allocation2 + $0x50] sm:$0xff] %v246
  %263 = vst [vmem:[#allocation2 + $0x58] sm:$0xff] %v247
  %264 = vst [vmem:[#allocation2 + $0x60] sm:$0xff] %v248
  %265 = vst [vmem:[#allocation2 + $0x68] sm:$0xff] %v249
  %266 = vst [vmem:[#allocation2 + $0x70] sm:$0xff] %v250
  %267 = vst [vmem:[#allocation2 + $0x78] sm:$0xff] %v251
  // Predicated region
  $region30: #{sgc2_forward.3} parent=0 // pred_check
    %p268 = pneg %p23
  $region31: #{sgc2_forward.3} parent=0 // pred_check_branch
    %270 = sbr.rel (%p268) target = $region33
  $region32: #{sgc2_forward.3} parent=0 // pred_region
    %v271 = vld [vmem:[#allocation2] sm:$0xff]
    %v272 = vld [vmem:[#allocation2 + $0x8] sm:$0xff]
    %v273 = vld [vmem:[#allocation2 + $0x10] sm:$0xff]
    %v274 = vld [vmem:[#allocation2 + $0x18] sm:$0xff]
    %v275 = vld [vmem:[#allocation2 + $0x20] sm:$0xff]
    %v276 = vld [vmem:[#allocation2 + $0x28] sm:$0xff]
    %v277 = vld [vmem:[#allocation2 + $0x30] sm:$0xff]
    %v278 = vld [vmem:[#allocation2 + $0x38] sm:$0xff]
    %v279 = vld [vmem:[#allocation2 + $0x40] sm:$0xff]
    %v280 = vld [vmem:[#allocation2 + $0x48] sm:$0xff]
    %v281 = vld [vmem:[#allocation2 + $0x50] sm:$0xff]
    %v282 = vld [vmem:[#allocation2 + $0x58] sm:$0xff]
    %v283 = vld [vmem:[#allocation2 + $0x60] sm:$0xff]
    %v284 = vld [vmem:[#allocation2 + $0x68] sm:$0xff]
    %v285 = vld [vmem:[#allocation2 + $0x70] sm:$0xff]
    %v286 = vld [vmem:[#allocation2 + $0x78] sm:$0xff]
    %v287 = vpack.c.bf16 %v272, %v271
    %v288 = vpack.c.bf16 %v274, %v273
    %v289 = vpack.c.bf16 %v276, %v275
    %v290 = vpack.c.bf16 %v278, %v277
    %v291 = vpack.c.bf16 %v280, %v279
    %v292 = vpack.c.bf16 %v282, %v281
    %v293 = vpack.c.bf16 %v284, %v283
    %v294 = vpack.c.bf16 %v286, %v285
    %v295 = vld [vmem:[%s2] sm:$0xf]
    %v296 = vld [vmem:[%s2 + $0x4] sm:$0xf]
    %v297 = vld [vmem:[%s2 + $0x8] sm:$0xf]
    %v298 = vld [vmem:[%s2 + $0xc] sm:$0xf]
    %v299 = vld [vmem:[%s2 + $0x10] sm:$0xf]
    %v300 = vld [vmem:[%s2 + $0x14] sm:$0xf]
    %v301 = vld [vmem:[%s2 + $0x18] sm:$0xf]
    %v302 = vld [vmem:[%s2 + $0x1c] sm:$0xf]
    %v303 = vld [vmem:[%s2 + $0x20] sm:$0xf]
    %v304 = vld [vmem:[%s2 + $0x24] sm:$0xf]
    %v305 = vld [vmem:[%s2 + $0x28] sm:$0xf]
    %v306 = vld [vmem:[%s2 + $0x2c] sm:$0xf]
    %v307 = vld [vmem:[%s2 + $0x30] sm:$0xf]
    %v308 = vld [vmem:[%s2 + $0x34] sm:$0xf]
    %v309 = vld [vmem:[%s2 + $0x38] sm:$0xf]
    %v310 = vld [vmem:[%s2 + $0x3c] sm:$0xf]
    %v311 = vld [vmem:[%s3] sm:$0x1]
    %v313 = vperm.slane %v311, 0
    %v331 = vunpack.c.l.b16 %v295
    %v332 = vunpack.c.l.b16 %v296
    %v333 = vunpack.c.l.b16 %v297
    %v334 = vunpack.c.l.b16 %v298
    %v335 = vunpack.c.l.b16 %v299
    %v336 = vunpack.c.l.b16 %v300
    %v337 = vunpack.c.l.b16 %v301
    %v338 = vunpack.c.l.b16 %v302
    %v339 = vunpack.c.l.b16 %v303
    %v340 = vunpack.c.l.b16 %v304
    %v341 = vunpack.c.l.b16 %v305
    %v342 = vunpack.c.l.b16 %v306
    %v343 = vunpack.c.l.b16 %v307
    %v344 = vunpack.c.l.b16 %v308
    %v345 = vunpack.c.l.b16 %v309
    %v346 = vunpack.c.l.b16 %v310
    %v347 = vpack.c.b16 %v332, %v331
    %v348 = vpack.c.b16 %v334, %v333
    %v349 = vpack.c.b16 %v336, %v335
    %v350 = vpack.c.b16 %v338, %v337
    %v351 = vpack.c.b16 %v340, %v339
    %v352 = vpack.c.b16 %v342, %v341
    %v353 = vpack.c.b16 %v344, %v343
    %v354 = vpack.c.b16 %v346, %v345
    %363 = vmatpush.bf16.msra.mxu0 %v354
    %364 = vmatpush.bf16.msra.mxu0 %v353
    %365 = vmatpush.bf16.msra.mxu0 %v352
    %366 = vmatpush.bf16.msra.mxu0 %v351
    %367 = vmatpush.bf16.msra.mxu0 %v350
    %368 = vmatpush.bf16.msra.mxu0 %v349
    %369 = vmatpush.bf16.msra.mxu0 %v348
    %370 = vmatpush.bf16.msra.mxu0 %v347
    %371 = vmatmul.bf16.gmra.mxu0 %v287
    %v372 = vpop.f32.mrf.mxu0
    %v373 = vadd.f32 %v313, %v372
    %v374 = vpop.f32.mrf.mxu0
    %v375 = vadd.f32 %v313, %v374
    %376 = vmatmul.bf16.gmra.mxu0 %v288
    %v377 = vpop.f32.mrf.mxu0
    %v378 = vadd.f32 %v313, %v377
    %v379 = vpop.f32.mrf.mxu0
    %v380 = vadd.f32 %v313, %v379
    %381 = vmatmul.bf16.gmra.mxu0 %v289
    %v382 = vpop.f32.mrf.mxu0
    %v383 = vadd.f32 %v313, %v382
    %v384 = vpop.f32.mrf.mxu0
    %v385 = vadd.f32 %v313, %v384
    %386 = vmatmul.bf16.gmra.mxu0 %v290
    %v387 = vpop.f32.mrf.mxu0
    %v388 = vadd.f32 %v313, %v387
    %v389 = vpop.f32.mrf.mxu0
    %v390 = vadd.f32 %v313, %v389
    %391 = vmatmul.bf16.gmra.mxu0 %v291
    %v392 = vpop.f32.mrf.mxu0
    %v393 = vadd.f32 %v313, %v392
    %v394 = vpop.f32.mrf.mxu0
    %v395 = vadd.f32 %v313, %v394
    %396 = vmatmul.bf16.gmra.mxu0 %v292
    %v397 = vpop.f32.mrf.mxu0
    %v398 = vadd.f32 %v313, %v397
    %v399 = vpop.f32.mrf.mxu0
    %v400 = vadd.f32 %v313, %v399
    %401 = vmatmul.bf16.gmra.mxu0 %v293
    %v402 = vpop.f32.mrf.mxu0
    %v403 = vadd.f32 %v313, %v402
    %v404 = vpop.f32.mrf.mxu0
    %v405 = vadd.f32 %v313, %v404
    %406 = vmatmul.bf16.gmra.mxu0 %v294
    %v407 = vpop.f32.mrf.mxu0
    %v408 = vadd.f32 %v313, %v407
    %v409 = vpop.f32.mrf.mxu0
    %v410 = vadd.f32 %v313, %v409
    %411 = vdwg.mxu0
    %v412 = vmax.f32 %v373, 0.0
    %v413 = vmax.f32 %v375, 0.0
    %v414 = vmax.f32 %v378, 0.0
    %v415 = vmax.f32 %v380, 0.0
    %v416 = vmax.f32 %v383, 0.0
    %v417 = vmax.f32 %v385, 0.0
    %v418 = vmax.f32 %v388, 0.0
    %v419 = vmax.f32 %v390, 0.0
    %v420 = vmax.f32 %v393, 0.0
    %v421 = vmax.f32 %v395, 0.0
    %v422 = vmax.f32 %v398, 0.0
    %v423 = vmax.f32 %v400, 0.0
    %v424 = vmax.f32 %v403, 0.0
    %v425 = vmax.f32 %v405, 0.0
    %v426 = vmax.f32 %v408, 0.0
    %v427 = vmax.f32 %v410, 0.0
    %v428 = vpack.c.bf16 %v413, %v412
    %v429 = vpack.c.bf16 %v415, %v414
    %v430 = vpack.c.bf16 %v417, %v416
    %v431 = vpack.c.bf16 %v419, %v418
    %v432 = vpack.c.bf16 %v421, %v420
    %v433 = vpack.c.bf16 %v423, %v422
    %v434 = vpack.c.bf16 %v425, %v424
    %v435 = vpack.c.bf16 %v427, %v426
    %v436 = vld [vmem:[%s4] sm:$0xf]
    %v437 = vld [vmem:[%s4 + $0x4] sm:$0xf]
    %v438 = vld [vmem:[%s4 + $0x8] sm:$0xf]
    %v439 = vld [vmem:[%s4 + $0xc] sm:$0xf]
    %v440 = vld [vmem:[%s4 + $0x10] sm:$0xf]
    %v441 = vld [vmem:[%s4 + $0x14] sm:$0xf]
    %v442 = vld [vmem:[%s4 + $0x18] sm:$0xf]
    %v443 = vld [vmem:[%s4 + $0x1c] sm:$0xf]
    %v444 = vld [vmem:[%s4 + $0x20] sm:$0xf]
    %v445 = vld [vmem:[%s4 + $0x24] sm:$0xf]
    %v446 = vld [vmem:[%s4 + $0x28] sm:$0xf]
    %v447 = vld [vmem:[%s4 + $0x2c] sm:$0xf]
    %v448 = vld [vmem:[%s4 + $0x30] sm:$0xf]
    %v449 = vld [vmem:[%s4 + $0x34] sm:$0xf]
    %v450 = vld [vmem:[%s4 + $0x38] sm:$0xf]
    %v451 = vld [vmem:[%s4 + $0x3c] sm:$0xf]
    %v452 = vld [vmem:[%s5] sm:$0x1]
    %v454 = vperm.slane %v452, 0
    %v472 = vunpack.c.l.b16 %v436
    %v473 = vunpack.c.l.b16 %v437
    %v474 = vunpack.c.l.b16 %v438
    %v475 = vunpack.c.l.b16 %v439
    %v476 = vunpack.c.l.b16 %v440
    %v477 = vunpack.c.l.b16 %v441
    %v478 = vunpack.c.l.b16 %v442
    %v479 = vunpack.c.l.b16 %v443
    %v480 = vunpack.c.l.b16 %v444
    %v481 = vunpack.c.l.b16 %v445
    %v482 = vunpack.c.l.b16 %v446
    %v483 = vunpack.c.l.b16 %v447
    %v484 = vunpack.c.l.b16 %v448
    %v485 = vunpack.c.l.b16 %v449
    %v486 = vunpack.c.l.b16 %v450
    %v487 = vunpack.c.l.b16 %v451
    %v488 = vpack.c.b16 %v473, %v472
    %v489 = vpack.c.b16 %v475, %v474
    %v490 = vpack.c.b16 %v477, %v476
    %v491 = vpack.c.b16 %v479, %v478
    %v492 = vpack.c.b16 %v481, %v480
    %v493 = vpack.c.b16 %v483, %v482
    %v494 = vpack.c.b16 %v485, %v484
    %v495 = vpack.c.b16 %v487, %v486
    %504 = vmatpush.bf16.msra.mxu0 %v495
    %505 = vmatpush.bf16.msra.mxu0 %v494
    %506 = vmatpush.bf16.msra.mxu0 %v493
    %507 = vmatpush.bf16.msra.mxu0 %v492
    %508 = vmatpush.bf16.msra.mxu0 %v491
    %509 = vmatpush.bf16.msra.mxu0 %v490
    %510 = vmatpush.bf16.msra.mxu0 %v489
    %511 = vmatpush.bf16.msra.mxu0 %v488
    %512 = vmatmul.bf16.gmra.mxu0 %v428
    %v513 = vpop.f32.mrf.mxu0
    %v514 = vadd.f32 %v454, %v513
    %v515 = vpop.f32.mrf.mxu0
    %v516 = vadd.f32 %v454, %v515
    %517 = vmatmul.bf16.gmra.mxu0 %v429
    %v518 = vpop.f32.mrf.mxu0
    %v519 = vadd.f32 %v454, %v518
    %v520 = vpop.f32.mrf.mxu0
    %v521 = vadd.f32 %v454, %v520
    %522 = vmatmul.bf16.gmra.mxu0 %v430
    %v523 = vpop.f32.mrf.mxu0
    %v524 = vadd.f32 %v454, %v523
    %v525 = vpop.f32.mrf.mxu0
    %v526 = vadd.f32 %v454, %v525
    %527 = vmatmul.bf16.gmra.mxu0 %v431
    %v528 = vpop.f32.mrf.mxu0
    %v529 = vadd.f32 %v454, %v528
    %v530 = vpop.f32.mrf.mxu0
    %v531 = vadd.f32 %v454, %v530
    %532 = vmatmul.bf16.gmra.mxu0 %v432
    %v533 = vpop.f32.mrf.mxu0
    %v534 = vadd.f32 %v454, %v533
    %v535 = vpop.f32.mrf.mxu0
    %v536 = vadd.f32 %v454, %v535
    %537 = vmatmul.bf16.gmra.mxu0 %v433
    %v538 = vpop.f32.mrf.mxu0
    %v539 = vadd.f32 %v454, %v538
    %v540 = vpop.f32.mrf.mxu0
    %v541 = vadd.f32 %v454, %v540
    %542 = vmatmul.bf16.gmra.mxu0 %v434
    %v543 = vpop.f32.mrf.mxu0
    %v544 = vadd.f32 %v454, %v543
    %v545 = vpop.f32.mrf.mxu0
    %v546 = vadd.f32 %v454, %v545
    %547 = vmatmul.bf16.gmra.mxu0 %v435
    %v548 = vpop.f32.mrf.mxu0
    %v549 = vadd.f32 %v454, %v548
    %v550 = vpop.f32.mrf.mxu0
    %v551 = vadd.f32 %v454, %v550
    %552 = vdwg.mxu0
    %553 = vst [vmem:[%s6] sm:$0xff] %v514
    %554 = vst [vmem:[%s6 + $0x8] sm:$0xff] %v516
    %555 = vst [vmem:[%s6 + $0x10] sm:$0xff] %v519
    %556 = vst [vmem:[%s6 + $0x18] sm:$0xff] %v521
    %557 = vst [vmem:[%s6 + $0x20] sm:$0xff] %v524
    %558 = vst [vmem:[%s6 + $0x28] sm:$0xff] %v526
    %559 = vst [vmem:[%s6 + $0x30] sm:$0xff] %v529
    %560 = vst [vmem:[%s6 + $0x38] sm:$0xff] %v531
    %561 = vst [vmem:[%s6 + $0x40] sm:$0xff] %v534
    %562 = vst [vmem:[%s6 + $0x48] sm:$0xff] %v536
    %563 = vst [vmem:[%s6 + $0x50] sm:$0xff] %v539
    %564 = vst [vmem:[%s6 + $0x58] sm:$0xff] %v541
    %565 = vst [vmem:[%s6 + $0x60] sm:$0xff] %v544
    %566 = vst [vmem:[%s6 + $0x68] sm:$0xff] %v546
    %567 = vst [vmem:[%s6 + $0x70] sm:$0xff] %v549
    %568 = vst [vmem:[%s6 + $0x78] sm:$0xff] %v551
  $region33: #{sgc2_forward.3} parent=0 // pred_fallthru
    _
  // Predicated region
  $region34: #{sgc2_forward.3} parent=0 // pred_check
    _
  $region35: #{sgc2_forward.3} parent=0 // pred_check_branch
    %570 = sbr.rel (0) target = $region37
  $region36: #{sgc2_forward.3} parent=0 // pred_region
    _
  $region37: #{sgc2_forward.3} parent=0 // pred_fallthru
    _
  // Predicated region
  $region38: #{sgc2_forward.3} parent=0 // pred_check
    _
  $region39: #{sgc2_forward.3} parent=0 // pred_check_branch
    %572 = sbr.rel (0) target = $region41
  $region40: #{sgc2_forward.3} parent=0 // pred_region
    _
  $region41: #{sgc2_forward.3} parent=0 // pred_fallthru
    _

</llo_original>
